<compile_context>
chip_gen: v7x
topology: tpu7x:2x2x1
jax: 0.10.0
libtpu: 0.0.40
codegen_flags: <defaults>
</compile_context>

<pallas_src>
import jax
import jax.numpy as jnp
from jax.experimental import pallas as pl
from jax.experimental.pallas import tpu as pltpu


_VMEM_BUDGET_BYTES = 24 << 20   # double-buffered in+out budget (v7x-safe: 64 MiB phys / 32 MiB scoped)
_TARGET_BLOCK_BYTES = 4 << 20   # per-block DMA target (~0.35 us/step overhead ~ 1.1 MB of HBM @ 3.2 TB/s)
_MIN_PALLAS_BYTES = 2 << 20     # below this, plain XLA slice wins (launch + masked-store overhead)


def _chomp_copy_kernel(x_ref, o_ref):
    # Trim path: the input block already excludes the chomped tail.
    o_ref[...] = x_ref[...]


def _chomp_slice_kernel(x_ref, o_ref):
    # Contiguous path: input block carries the full L; drop the tail with a
    # static slice in VMEM (zero-cost ref view).
    l_out = o_ref.shape[-1]
    o_ref[...] = x_ref[:, :l_out]


def _sublane_pack(itemsize: int) -> int:
    # Rows per packed sublane group: 8 for 4-byte, 16 for 2-byte, 32 for 1-byte.
    return max(8, 32 // max(1, itemsize))


def _choose_row_tile(rows: int, in_lanes: int, itemsize: int) -> int:
    """Row tile: big enough to amortize per-grid-step overhead, small enough
    that 2x(in_block + out_block) stays under the v7x-safe VMEM budget,
    rounded to the dtype's sublane packing, and capped so the 'parallel'
    grid axis has >= 2 steps whenever possible (v7x shards it across 2 TCs)."""
    sub = _sublane_pack(itemsize)
    bytes_per_row = max(1, in_lanes * itemsize)
    t = max(sub, _TARGET_BLOCK_BYTES // bytes_per_row)
    t = max(sub, (t // sub) * sub)
    t = min(t, rows)
    if t >= rows and rows > sub:
        # Guarantee >= 2 grid steps so both v7x TensorCores get work.
        half = -(-rows // 2)                      # ceil(rows / 2)
        t = min(rows, max(sub, -(-half // sub) * sub))
    return max(1, t)


def chomp1d(x: jax.Array, chomp_size: int, *,
            min_pallas_bytes: int = _MIN_PALLAS_BYTES) -> jax.Array:
    """Pallas equivalent of Chomp1d.forward: x[:, :, :-chomp_size]."""
    assert chomp_size > 0, "chomp_size must be positive"
    n, c, l = x.shape
    l_out = l - chomp_size
    assert l_out > 0, "chomp_size must be smaller than the sequence length"

    rows = n * c
    itemsize = x.dtype.itemsize
    sub = _sublane_pack(itemsize)

    # Small-problem fallback: kernel launch + grid-step + lane-masked stores
    # dominate; XLA's fused slice/copy is strictly cheaper.
    if rows * l_out * itemsize < min_pallas_bytes:
        return x[:, :, :l_out]

    # Pathological rows: even a single sublane-pack of rows busts the VMEM
    # budget -> fall back to XLA rather than risk VMEM OOM.
    if 2 * sub * (l + l_out) * itemsize > _VMEM_BUDGET_BYTES:
        return x[:, :, :l_out]

    x2d = x.reshape(rows, l)

    # Trim the chomped tail at the DMA level only when each per-row segment is
    # still burst-friendly (>= 1 KiB) and the chomp is a non-trivial fraction
    # of L; otherwise one contiguous full-L read + VMEM slice is cheaper.
    trim_input = (
        (l_out % 128 == 0)
        and (l_out * itemsize >= 1024)
        and (10 * chomp_size >= l)
    )
    in_lanes = l_out if trim_input else l

    row_tile = _choose_row_tile(rows, in_lanes, itemsize)
    grid = (pl.cdiv(rows, row_tile),)

    if trim_input:
        kernel = _chomp_copy_kernel
        in_spec = pl.BlockSpec((row_tile, l_out), lambda i: (i, 0))
    else:
        kernel = _chomp_slice_kernel
        in_spec = pl.BlockSpec((row_tile, l), lambda i: (i, 0))

    # Explicit scoped-VMEM budget: double-buffered in+out blocks + headroom,
    # clamped to stay safe on v5e/v6e/v7x instead of relying on gen defaults.
    in_block_bytes = row_tile * in_lanes * itemsize
    out_block_bytes = row_tile * l_out * itemsize
    footprint = 2 * (in_block_bytes + out_block_bytes)
    vmem_limit = int(max(16 << 20, min(footprint + (4 << 20), 28 << 20)))

    out2d = pl.pallas_call(
        kernel,
        out_shape=jax.ShapeDtypeStruct((rows, l_out), x.dtype),
        grid_spec=pltpu.PrefetchScalarGridSpec(
            num_scalar_prefetch=0,
            grid=grid,
            in_specs=[in_spec],
            out_specs=pl.BlockSpec((row_tile, l_out), lambda i: (i, 0)),
        ),
        compiler_params=pltpu.CompilerParams(
            dimension_semantics=("parallel",),
            vmem_limit_bytes=vmem_limit,
        ),
    )(x2d)
    return out2d.reshape(n, c, l_out)


if __name__ == "__main__":
    def _check(x, chomp, **kw):
        out = jax.block_until_ready(chomp1d(x, chomp, **kw))
        ref = x[:, :, :-chomp]
        assert out.shape == ref.shape, (out.shape, ref.shape)
        assert out.dtype == ref.dtype, (out.dtype, ref.dtype)
        assert jnp.array_equal(out, ref), "Pallas output mismatch vs reference"

    key = jax.random.PRNGKey(0)
    k1, k2, k3, k4, k5 = jax.random.split(key, 5)

    # 1) Tiny TCN-style shape -> takes the XLA small-problem fallback.
    _check(jax.random.normal(k1, (2, 4, 16), dtype=jnp.float32), 3)

    # 2) Pallas path, unaligned L_out=64; rows=20 is NOT a multiple of the
    #    chosen row_tile (16) -> exercises masked partial row blocks.
    _check(jax.random.normal(k2, (5, 4, 67), dtype=jnp.float32), 3,
           min_pallas_bytes=0)

    # 3) Pallas path, 128-aligned L_out but sub-1KiB segments / tiny chomp
    #    fraction -> contiguous full-L read + VMEM slice.
    _check(jax.random.normal(k3, (2, 16, 131), dtype=jnp.float32), 3,
           min_pallas_bytes=0)

    # 4) Pallas path, DMA-trim branch (L_out=256 aligned, 20% chomp,
    #    >= 1 KiB per-row segments).
    _check(jax.random.normal(k4, (2, 16, 320), dtype=jnp.float32), 64,
           min_pallas_bytes=0)

    # 5) Pallas path, bf16 -> 16-row sublane packing in the row tile.
    _check(jax.random.normal(k5, (4, 8, 259), dtype=jnp.bfloat16), 3,
           min_pallas_bytes=0)

    print("KERNEL_OK")
</pallas_src>

<mosaic_0001>
module attributes {stable_mosaic.version = 11 : i64} {
  func.func @_chomp_slice_kernel(%arg0: i32, %arg1: memref<16x67xf32, #tpu.memory_space<vmem>>, %arg2: memref<16x64xf32, #tpu.memory_space<vmem>>) attributes {dimension_semantics = [#tpu.dimension_semantics<parallel>], iteration_bounds = array<i64: 2>, scalar_prefetch = 0 : i64, scratch_operands = 0 : i64, tpu.core_type = #tpu.core_type<tc>, window_params = [{transform_indices = @transform_0, window_bounds = array<i64: 16, 67>}, {transform_indices = @transform_1, window_bounds = array<i64: 16, 64>}]} {
    %c0 = arith.constant 0 : index
    %c0_0 = arith.constant 0 : index
    %0 = vector.load %arg1[%c0, %c0_0] : memref<16x67xf32, #tpu.memory_space<vmem>>, vector<16x64xf32>
    %c0_1 = arith.constant 0 : index
    %c0_2 = arith.constant 0 : index
    %1 = vector.load %arg2[%c0_1, %c0_2] : memref<16x64xf32, #tpu.memory_space<vmem>>, vector<16x64xf32>
    tpu.vector_store %arg2[%c0_1, %c0_2], %0 {strides = array<i32>} : memref<16x64xf32, #tpu.memory_space<vmem>>, vector<16x64xf32>,
    return
  }
  func.func @transform_0(%arg0: i32) -> (i32, i32) {
    %c0_i32 = arith.constant 0 : i32
    %c0_i32_0 = arith.constant 0 : i32
    return %arg0, %c0_i32 : i32, i32
  }
  func.func @transform_1(%arg0: i32) -> (i32, i32) {
    %c0_i32 = arith.constant 0 : i32
    %c0_i32_0 = arith.constant 0 : i32
    return %arg0, %c0_i32 : i32, i32
  }
}

</mosaic_0001>

<llo_original>
// kernel: tpu_custom_call.1
$region0: #{tpu_custom_call.1}
  #allocation0 [shape = 'u32[]', space=smem, size = 0x4, offset = 0x4, fixed_abs, tag = 'smem constant byte address 0x4 - core index']
  #allocation1 [shape = 'u32[144,128]{1,0:T(1,128)}', space=vmem, size = 0x12000, scoped, tag = 'internal scratch']
  %s0 = inlined_call_operand.hbm [shape: f32[20,67], index: 0, kind: input, shape index: {}]
  %s1 = inlined_call_operand.hbm [shape: f32[20,64], index: 1, kind: output, shape index: {}]
  %s2 = sld [smem:[#allocation0]]
  $region41: #{tpu_custom_call.1} parent=0
    _
  %s4 = ssub.s32 1, %s2
  %s5 = scalar_select 0, %s4, %s2
  $region1: #{tpu_custom_call.1} parent=0
    #allocation2 [shape = 'u8[16384]{0}', space=vmem, size = 0x4000, scoped, tag = 'input window, operand 0']
    #allocation3 [shape = 's32[2]{0}', space=sflag, size = 0x8, scoped, tag = 'scoped memory for tpu_custom_call.1']
    #allocation4 [shape = 's32[2]{0}', space=sflag, size = 0x8, scoped, tag = 'scoped memory for tpu_custom_call.1']
    #allocation5 [shape = 'u8[16384]{0}', space=vmem, size = 0x4000, scoped, tag = 'output window, operand 0']
    %6 = vsyncpa [#allocation3], 0
    %s7 = scalar_lea.sflag [#allocation3], 1
    %8 = vsyncpa %s7, 0
    %9 = vsyncpa [#allocation4], 0
    %s10 = scalar_lea.sflag [#allocation4], 1
    %11 = vsyncpa %s10, 0
    loop: start=0, step=1, limit=4
    $region2: #{tpu_custom_call.1} parent=1 // loop_pre_header
      _
    $region3: #{tpu_custom_call.1} parent=1 // loop_header
      %s13 = sphi 0, %s17
      %p14 = scmp.ge.s32.totalorder %s13, 4
      %s23 = sphi 0, %s25
      %s26 = sphi 0, %s23
      %s27 = sphi 0, %s26
      %s43 = sphi 0, %s27
      %s49 = sphi 0, %s51
      %s52 = sphi 0, %s49
      %s53 = sphi 0, %s52
      %s69 = sphi 0, %s53
    $region4: #{tpu_custom_call.1} parent=1 // loop_header_branch
      %16 = sbr.rel (%p14) target = $region8
    $region5: #{tpu_custom_call.1} parent=1 // loop_body
      %s18 = ssub.s32 %s13, 1
      %s19 = ssub.s32 %s13, 2
      %s20 = sadd.s32 %s13, 1
      %s21 = ssub.s32 %s13, %s20
      %p22 = scmp.eq.s32.totalorder %s21, 0
      %s24 = sadd.s32 %s23, 1
      %s25 = scalar_select %p22, %s23, %s24
      %p28 = pneg %p22
      %p29 = scmp.eq.s32.totalorder %s13, 1
      %p30 = por %p28, %p29
      %p31 = scmp.ne.s32.totalorder %s23, %s26
      %p32 = scmp.eq.s32.totalorder %s13, 0
      %p33 = por %p31, %p32
      %p34 = scmp.ne.s32.totalorder %s23, %s26
      %p35 = scmp.eq.s32.totalorder %s18, 1
      %p36 = por %p34, %p35
      %p37 = scmp.ne.s32.totalorder %s26, %s27
      %p38 = scmp.eq.s32.totalorder %s18, 0
      %p39 = por %p37, %p38
      %p40 = scmp.ne.s32.totalorder %s26, %s27
      %p41 = scmp.eq.s32.totalorder %s19, 1
      %p42 = por %p40, %p41
      %p44 = scmp.ne.s32.totalorder %s27, %s43
      %p45 = scmp.eq.s32.totalorder %s19, 0
      %p46 = por %p44, %p45
      %s47 = ssub.s32 %s13, %s20
      %p48 = scmp.eq.s32.totalorder %s47, 0
      %s50 = sadd.s32 %s49, 1
      %s51 = scalar_select %p48, %s49, %s50
      %p54 = pneg %p48
      %p55 = scmp.eq.s32.totalorder %s13, 1
      %p56 = por %p54, %p55
      %p57 = scmp.ne.s32.totalorder %s49, %s52
      %p58 = scmp.eq.s32.totalorder %s13, 0
      %p59 = por %p57, %p58
      %p60 = scmp.ne.s32.totalorder %s49, %s52
      %p61 = scmp.eq.s32.totalorder %s18, 1
      %p62 = por %p60, %p61
      %p63 = scmp.ne.s32.totalorder %s52, %s53
      %p64 = scmp.eq.s32.totalorder %s18, 0
      %p65 = por %p63, %p64
      %p66 = scmp.ne.s32.totalorder %s52, %s53
      %p67 = scmp.eq.s32.totalorder %s19, 1
      %p68 = por %p66, %p67
      %p70 = scmp.ne.s32.totalorder %s53, %s69
      %p71 = scmp.eq.s32.totalorder %s19, 0
      %p72 = por %p70, %p71
      %p73 = scmp.le.s32.totalorder 1, %s13
      %p74 = scmp.lt.s32.totalorder %s13, 3
      %p75 = pnand %p73, %p74
      %p76 = pneg %p75
      // Predicated region
      $region9: #{tpu_custom_call.1} parent=5 // pred_check
        _
      $region10: #{tpu_custom_call.1} parent=5 // pred_check_branch
        %78 = sbr.rel (%p75) target = $region12
      $region11: #{tpu_custom_call.1} parent=5 // pred_region
        %s79 = ssub.s32 %s13, 1
      $region12: #{tpu_custom_call.1} parent=5 // pred_fallthru
        _
      %p80 = scmp.lt.s32.totalorder %s13, 2
      // Predicated region
      $region13: #{tpu_custom_call.1} parent=5 // pred_check
        %p81 = pneg %p80
      $region14: #{tpu_custom_call.1} parent=5 // pred_check_branch
        %83 = sbr.rel (%p81) target = $region16
      $region15: #{tpu_custom_call.1} parent=5 // pred_region
        // Predicated region
        $region17: #{tpu_custom_call.1} parent=15 // pred_check
          %p84 = pneg %p33
        $region18: #{tpu_custom_call.1} parent=15 // pred_check_branch
          %86 = sbr.rel (%p84) target = $region20
        $region19: #{tpu_custom_call.1} parent=15 // pred_region
          %s87 = sand.u32 %s23, 1
          %s88 = scalar_lea.sflag [#allocation3], %s87
          %s89 = sand.u32 %s23, 1
          %s90 = smul.addr %s89, 16
          %s91 = scalar_lea.vmem [#allocation2], %s90
          %s92 = smul.u32 2, %s13
          %s93 = ssub.s32 3, %s92
          %p94 = scmp.lt.s32.totalorder %s93, 2
          %s95 = scalar_select %p94, %s93, 2
          %s96 = smul.u32 128, %s95
          %s98 = ssub.s32 256, %s96
          %99 = vsyncadd %s88, %s98
          %p100 = scmp.ne.s32.totalorder 0, %s96
          %s101 = smul.addr %s92, 128
          %s102 = scalar_lea.hbm %s0, %s101
          %s103 = smul.u32 8, %s95
          %s104 = sshll.u32 %s91, 4
          %s105 = int_to_ptr.vmem [resolvable:$true] %s104
          %s106 = sshll.u32 %s103, 4
          %110 = dma.hbm_to_vmem [thread:$0]  (%p100), %s102, %s106, %s105, %s88, 128, 128, 8
        $region20: #{tpu_custom_call.1} parent=15 // pred_fallthru
          _
      $region16: #{tpu_custom_call.1} parent=5 // pred_fallthru
        _
      %p111 = scmp.le.s32.totalorder 1, %s13
      %p112 = scmp.lt.s32.totalorder %s13, 3
      %p113 = pnand %p111, %p112
      %p114 = pneg %p113
      // Predicated region
      $region21: #{tpu_custom_call.1} parent=5 // pred_check
        _
      $region22: #{tpu_custom_call.1} parent=5 // pred_check_branch
        %116 = sbr.rel (%p113) target = $region24
      $region23: #{tpu_custom_call.1} parent=5 // pred_region
        %s117 = ssub.s32 %s13, 1
        %s118 = sand.u32 %s26, 1
        %s119 = scalar_lea.sflag [#allocation3], %s118
        %s120 = sand.u32 %s26, 1
        %s121 = smul.addr %s120, 16
        %s122 = scalar_lea.vmem [#allocation2], %s121
        // Predicated region
        $region25: #{tpu_custom_call.1} parent=23 // pred_check
          %p123 = pneg %p39
        $region26: #{tpu_custom_call.1} parent=23 // pred_check_branch
          %125 = sbr.rel (%p123) target = $region28
        $region27: #{tpu_custom_call.1} parent=23 // pred_region
          %126 = dma.done %s119, 256
        $region28: #{tpu_custom_call.1} parent=23 // pred_fallthru
          _
        %s127 = sand.u32 %s26, 1
        %s128 = scalar_lea.sflag [#allocation3], %s127
        %s129 = sand.u32 %s26, 1
        %s130 = smul.addr %s129, 16
        %s131 = scalar_lea.vmem [#allocation2], %s130
        %p132 = pneg %p39
        %p133 = pneg %p36
        %p134 = pneg %p65
        %p135 = pneg %p62
        %s136 = sand.u32 %s52, 1
        %s137 = scalar_lea.sflag [#allocation4], %s136
        %s138 = sand.u32 %s52, 1
        %s139 = smul.addr %s138, 16
        %s140 = scalar_lea.vmem [#allocation5], %s139
        %s141 = smul.u32 2, %s18
        %s142 = ssub.s32 3, %s141
        %p143 = scmp.lt.s32.totalorder %s142, 2
        %s144 = scalar_select %p143, %s142, 2
        %s145 = smul.u32 128, %s144
        %s146 = smul.u32 2, %s18
        %s147 = ssub.s32 3, %s146
        %p148 = scmp.lt.s32.totalorder %s147, 2
        %s149 = scalar_select %p148, %s147, 2
        %s150 = smul.u32 128, %s149
        %v151 = vld [vmem:[%s122] sm:$0xff]
        %v152 = vld [vmem:[%s122 + $0x8] sm:$0xff]
        %vm153 = vcmask 523264
        %154 = vst.msk [vmem:[%s140] sm:$0xff] %vm153, %v151
        %155 = vst.msk [vmem:[%s140 + $0x8] sm:$0xff] %vm153, %v152
        %s156 = sand.u32 %s52, 1
        %s157 = scalar_lea.sflag [#allocation4], %s156
        %s158 = sand.u32 %s52, 1
        %s159 = smul.addr %s158, 16
        %s160 = scalar_lea.vmem [#allocation5], %s159
        // Predicated region
        $region29: #{tpu_custom_call.1} parent=23 // pred_check
          %p161 = pneg %p62
        $region30: #{tpu_custom_call.1} parent=23 // pred_check_branch
          %163 = sbr.rel (%p161) target = $region32
        $region31: #{tpu_custom_call.1} parent=23 // pred_region
          %s164 = smul.u32 2, %s18
          %s165 = ssub.s32 3, %s164
          %p166 = scmp.lt.s32.totalorder %s165, 2
          %s167 = scalar_select %p166, %s165, 2
          %s168 = smul.u32 128, %s167
          %s170 = ssub.s32 256, %s168
          %171 = vsyncadd %s157, %s170
          %p172 = scmp.ne.s32.totalorder 0, %s168
          %s173 = smul.addr %s164, 128
          %s174 = scalar_lea.hbm %s1, %s173
          %s175 = smul.u32 8, %s167
          %s176 = sshll.u32 %s160, 4
          %s177 = int_to_ptr.vmem [resolvable:$true] %s176
          %s178 = sshll.u32 %s175, 4
          %182 = dma.vmem_to_hbm [thread:$0]  (%p172), %s177, %s178, %s174, %s157, 128, 128, 8
        $region32: #{tpu_custom_call.1} parent=23 // pred_fallthru
          _
      $region24: #{tpu_custom_call.1} parent=5 // pred_fallthru
        _
      %p183 = scmp.le.s32.totalorder 2, %s13
      // Predicated region
      $region33: #{tpu_custom_call.1} parent=5 // pred_check
        %p184 = pneg %p183
      $region34: #{tpu_custom_call.1} parent=5 // pred_check_branch
        %186 = sbr.rel (%p184) target = $region36
      $region35: #{tpu_custom_call.1} parent=5 // pred_region
        %s187 = ssub.s32 %s13, 2
        // Predicated region
        $region37: #{tpu_custom_call.1} parent=35 // pred_check
          %p188 = pneg %p68
        $region38: #{tpu_custom_call.1} parent=35 // pred_check_branch
          %190 = sbr.rel (%p188) target = $region40
        $region39: #{tpu_custom_call.1} parent=35 // pred_region
          %s191 = sand.u32 %s53, 1
          %s192 = scalar_lea.sflag [#allocation4], %s191
          %s193 = sand.u32 %s53, 1
          %s194 = smul.addr %s193, 16
          %s195 = scalar_lea.vmem [#allocation5], %s194
          %196 = dma.done %s192, 256
        $region40: #{tpu_custom_call.1} parent=35 // pred_fallthru
          _
      $region36: #{tpu_custom_call.1} parent=5 // pred_fallthru
        _
    $region6: #{tpu_custom_call.1} parent=1 // loop_footer
      %s17 = sadd.s32 1, %s13
    $region7: #{tpu_custom_call.1} parent=1 // loop_footer_branch
      %12 = sbr.rel target = $region3
    $region8: #{tpu_custom_call.1} parent=1 // loop_exit
      _
    %197 = vsyncpa [#allocation3], 1
    %s198 = scalar_lea.sflag [#allocation3], 1
    %199 = vsyncpa %s198, 1
    %200 = vsyncpa [#allocation4], 1
    %s201 = scalar_lea.sflag [#allocation4], 1
    %202 = vsyncpa %s201, 1

</llo_original>
